<compile_context>
chip_gen: v7x
topology: tpu7x:2x2x1
jax: 0.10.0
libtpu: 0.0.40
codegen_flags: <defaults>
</compile_context>

<pallas_src>
import functools

import jax
import jax.numpy as jnp
from jax.experimental import pallas as pl
from jax.experimental.pallas import tpu as pltpu


def _round_up(a, m):
    return (a + m - 1) // m * m


def _cdiv(a, b):
    return (a + b - 1) // b


# --------------------------------------------------------------------------- #
# Kernel
# --------------------------------------------------------------------------- #
def _variational_kernel(x_ref, w_ref, b_ref, eps_ref, out_ref, *, lp):
    """One batch tile.

    x_ref   : (TB, D)     f32/bf16  input tile (cast to bf16 for the MXU)
    w_ref   : (D, 2*Lp)   bf16      fused [W_mu^T | W_logvar^T], VMEM-resident
    b_ref   : (1, 2*Lp)   f32       fused [b_mu | b_logvar]
    eps_ref : (TB, Lp)    f32       standard-normal noise
    out_ref : (TB, 3*Lp)  f32       lane-dense slab [mu | logvar | z]
    """
    # Single fused GEMM on the MXU: bf16 operands, f32 accumulation.
    x = x_ref[...].astype(jnp.bfloat16)
    y = jnp.dot(x, w_ref[...], preferred_element_type=jnp.float32) + b_ref[...]

    # Lane-aligned slices (lp is a multiple of 128 -> no cross-tile relayout).
    mu = y[:, :lp]
    logvar = y[:, lp:]

    # Reparameterization trick in f32 on the VPU/EUP.
    std = jnp.exp(0.5 * logvar)
    z = mu + eps_ref[...] * std

    # Two plain, unmasked, lane-aligned stores (no concat / temporary slab).
    out_ref[:, : 2 * lp] = y          # [mu | logvar]
    out_ref[:, 2 * lp:] = z           # [z]


# --------------------------------------------------------------------------- #
# One-time parameter preparation (NOT in the per-call path)
# --------------------------------------------------------------------------- #
def prepare_variational_params(w_mu, b_mu, w_logvar, b_logvar,
                               compute_dtype=jnp.bfloat16):
    """Fuse fc_mu / fc_logvar into a single pre-transposed, lane-padded weight.

    Returns (w_fused (D, 2*Lp) bf16, b_fused (1, 2*Lp) f32, Lp) with
    Lp = round_up(L, 128) so every in-kernel slice / store is 128-lane aligned
    and 2*Lp is a 256 multiple (fills the v6e/v7x 256-wide MXU N side).
    Padded columns are zero -> padded logvar = 0, padded mu = 0 (discarded).
    """
    L, D = w_mu.shape
    lp = _round_up(L, 128)

    w = jnp.zeros((D, 2 * lp), dtype=compute_dtype)
    w = w.at[:, :L].set(w_mu.T.astype(compute_dtype))
    w = w.at[:, lp:lp + L].set(w_logvar.T.astype(compute_dtype))

    b = jnp.zeros((1, 2 * lp), dtype=jnp.float32)
    b = b.at[0, :L].set(b_mu.astype(jnp.float32))
    b = b.at[0, lp:lp + L].set(b_logvar.astype(jnp.float32))
    return w, b, lp


# --------------------------------------------------------------------------- #
# Tile sizing
# --------------------------------------------------------------------------- #
def _choose_batch_tile(batch, input_dim, lp, x_itemsize):
    """Largest MXU/bf16-friendly batch tile that fits a per-generation VMEM budget."""
    try:
        cap = int(pltpu.get_tpu_info().vmem_capacity_bytes)
    except Exception:  # no TPU visible (e.g. interpret/CPU run)
        cap = 64 * 1024 * 1024
    # <= 3/4 of physical VMEM, hard cap 48 MiB (v7x only has 64 MiB per TC).
    budget = int(min(3 * cap // 4, 48 * 1024 * 1024))

    # Fused weight + bias stay VMEM-resident (constant index_map); the default
    # pipeline still double-buffers them, so count them twice.
    resident = 2 * (input_dim * 2 * lp * 2 + 2 * lp * 4)
    avail = max(budget - resident, 2 * 1024 * 1024)

    # Double-buffered per-row traffic: x tile + eps tile + output slab.
    per_row = 2 * (input_dim * x_itemsize + lp * 4 + 3 * lp * 4)
    tb = int(avail // per_row)

    # Round to >=256 rows when possible (fills MXU M side, full bf16 vregs),
    # otherwise multiples of 16 (bf16 packs 16 sublanes / vreg).
    if tb >= 256:
        tb = tb // 256 * 256
    elif tb >= 16:
        tb = tb // 16 * 16
    else:
        tb = max(8, tb // 8 * 8)

    # Keep >= 4 grid steps on large batches so both v7x TensorCores get work.
    if batch >= 1024:
        tb = min(tb, max(256, _round_up(_cdiv(batch, 4), 256)))

    # A single full-dim block is always legal (no (8,) divisibility issue).
    if batch <= tb:
        return batch, budget

    # Otherwise keep TB a multiple of 8 and <= batch; last tile may be ragged.
    tb = max(8, min(tb, batch // 8 * 8))
    return tb, budget


# --------------------------------------------------------------------------- #
# Forward wrapper
# --------------------------------------------------------------------------- #
def variational_layer_forward(x, w_fused, b_fused, latent_dim, latent_pad, rng_key):
    """x: (B, D) f32 or bf16; w_fused: (D, 2*Lp) bf16; b_fused: (1, 2*Lp) f32.

    Returns (z, mu, logvar), each (B, latent_dim) f32 — same semantics as
    VariationalLayer.forward (eps ~ N(0, 1) drawn from rng_key).
    """
    B, D = x.shape
    L, lp = latent_dim, latent_pad
    x_itemsize = jnp.dtype(x.dtype).itemsize

    TB, vmem_budget = _choose_batch_tile(B, D, lp, x_itemsize)
    n_tiles = _cdiv(B, TB)

    # Standard-normal noise, lane-aligned (only the first L columns are used).
    eps = jax.random.normal(rng_key, (B, lp), dtype=jnp.float32)

    cost = pl.CostEstimate(
        flops=2 * B * D * 2 * lp,
        transcendentals=B * lp,                      # jnp.exp in the reparam step
        bytes_accessed=(B * D * x_itemsize           # x
                        + D * 2 * lp * 2             # fused bf16 weight
                        + 2 * lp * 4                 # fused bias
                        + B * lp * 4                 # eps
                        + B * 3 * lp * 4),           # output slab
    )

    out = pl.pallas_call(
        functools.partial(_variational_kernel, lp=lp),
        out_shape=jax.ShapeDtypeStruct((B, 3 * lp), jnp.float32),
        grid_spec=pltpu.PrefetchScalarGridSpec(
            num_scalar_prefetch=0,
            grid=(n_tiles,),                                   # batch grid, auto double-buffered
            in_specs=[
                pl.BlockSpec((TB, D), lambda i: (i, 0)),       # x tile
                pl.BlockSpec((D, 2 * lp), lambda i: (0, 0)),   # fused W (VMEM-resident)
                pl.BlockSpec((1, 2 * lp), lambda i: (0, 0)),   # fused b (VMEM-resident)
                pl.BlockSpec((TB, lp), lambda i: (i, 0)),      # eps tile
            ],
            out_specs=pl.BlockSpec((TB, 3 * lp), lambda i: (i, 0)),
        ),
        compiler_params=pltpu.CompilerParams(
            # Batch axis is embarrassingly parallel -> shards across v7x's 2 TCs.
            dimension_semantics=("parallel",),
            vmem_limit_bytes=int(vmem_budget),
        ),
        cost_estimate=cost,
    )(x, w_fused, b_fused, eps)

    mu = out[:, :L]
    logvar = out[:, lp:lp + L]
    z = out[:, 2 * lp:2 * lp + L]
    return z, mu, logvar


# --------------------------------------------------------------------------- #
# Demo / correctness check
# --------------------------------------------------------------------------- #
if __name__ == "__main__":
    B = 16
    INPUT_DIM = 32
    LATENT_DIM = 16

    key = jax.random.PRNGKey(0)
    kx, kwm, kbm, kwl, kbl, keps = jax.random.split(key, 6)

    bound = 1.0 / (INPUT_DIM ** 0.5)
    x = jax.random.normal(kx, (B, INPUT_DIM), dtype=jnp.float32)
    w_mu = jax.random.uniform(kwm, (LATENT_DIM, INPUT_DIM), jnp.float32, -bound, bound)
    b_mu = jax.random.uniform(kbm, (LATENT_DIM,), jnp.float32, -bound, bound)
    w_logvar = jax.random.uniform(kwl, (LATENT_DIM, INPUT_DIM), jnp.float32, -bound, bound)
    b_logvar = jax.random.uniform(kbl, (LATENT_DIM,), jnp.float32, -bound, bound)

    # One-time parameter prep (fusion + transpose + lane padding + bf16).
    w_fused, b_fused, LP = prepare_variational_params(w_mu, b_mu, w_logvar, b_logvar)

    z, mu, logvar = variational_layer_forward(
        x, w_fused, b_fused, latent_dim=LATENT_DIM, latent_pad=LP, rng_key=keps)
    jax.block_until_ready((z, mu, logvar))

    # Reference (f32 GEMM).  Kernel GEMM operands are bf16 -> relaxed tolerance.
    mu_ref = x @ w_mu.T + b_mu
    logvar_ref = x @ w_logvar.T + b_logvar
    assert jnp.allclose(mu, mu_ref, atol=5e-2, rtol=5e-2), "mu mismatch"
    assert jnp.allclose(logvar, logvar_ref, atol=5e-2, rtol=5e-2), "logvar mismatch"

    # z check: regenerate the exact eps the wrapper used and verify the
    # reparameterization relation against the kernel's own mu / logvar.
    eps_full = jax.random.normal(keps, (B, LP), dtype=jnp.float32)
    z_ref = mu + eps_full[:, :LATENT_DIM] * jnp.exp(0.5 * logvar)
    assert bool(jnp.all(jnp.isfinite(z))), "non-finite z"
    assert jnp.allclose(z, z_ref, atol=1e-4, rtol=1e-4), "z reparameterization mismatch"

    print("KERNEL_OK")
</pallas_src>

<mosaic_0001>
module attributes {stable_mosaic.version = 11 : i64} {
  func.func @_variational_kernel(%arg0: i32, %arg1: memref<16x32xf32, #tpu.memory_space<vmem>>, %arg2: memref<32x256xbf16, #tpu.memory_space<vmem>>, %arg3: memref<1x256xf32, #tpu.memory_space<vmem>>, %arg4: memref<16x128xf32, #tpu.memory_space<vmem>>, %arg5: memref<16x384xf32, #tpu.memory_space<vmem>>) attributes {dimension_semantics = [#tpu.dimension_semantics<parallel>], iteration_bounds = array<i64: 1>, scalar_prefetch = 0 : i64, scratch_operands = 0 : i64, tpu.core_type = #tpu.core_type<tc>, window_params = [{transform_indices = @transform_0, window_bounds = array<i64: 16, 32>}, {pipeline_mode = #tpu.pipeline_mode<synchronous>, transform_indices = @transform_1, window_bounds = array<i64: 32, 256>}, {pipeline_mode = #tpu.pipeline_mode<synchronous>, transform_indices = @transform_2, window_bounds = array<i64: 1, 256>}, {transform_indices = @transform_3, window_bounds = array<i64: 16, 128>}, {transform_indices = @transform_4, window_bounds = array<i64: 16, 384>}]} {
    %c0 = arith.constant 0 : index
    %c0_0 = arith.constant 0 : index
    %0 = vector.load %arg1[%c0, %c0_0] : memref<16x32xf32, #tpu.memory_space<vmem>>, vector<16x32xf32>
    %1 = arith.truncf %0 : vector<16x32xf32> to vector<16x32xbf16>
    %c0_1 = arith.constant 0 : index
    %c0_2 = arith.constant 0 : index
    %2 = vector.load %arg2[%c0_1, %c0_2] : memref<32x256xbf16, #tpu.memory_space<vmem>>, vector<32x256xbf16>
    %cst = arith.constant dense<0.000000e+00> : vector<16x256xf32>
    %3 = tpu.matmul %1, %2, %cst {dimension_numbers = #tpu.dot_dimension_numbers<[1], [0], [0], [1], [0, 0, 1, 1], [], []>} : vector<16x32xbf16>, vector<32x256xbf16>, vector<16x256xf32> -> vector<16x256xf32>
    %c0_3 = arith.constant 0 : index
    %c0_4 = arith.constant 0 : index
    %4 = vector.load %arg3[%c0_3, %c0_4] : memref<1x256xf32, #tpu.memory_space<vmem>>, vector<1x256xf32>
    %5 = vector.broadcast %4 : vector<1x256xf32> to vector<16x256xf32>
    %6 = arith.addf %3, %5 : vector<16x256xf32>
    %7 = vector.extract_strided_slice %6 {offsets = [0, 0], sizes = [16, 128], strides = [1, 1]} : vector<16x256xf32> to vector<16x128xf32>
    %8 = vector.extract_strided_slice %6 {offsets = [0, 128], sizes = [16, 128], strides = [1, 1]} : vector<16x256xf32> to vector<16x128xf32>
    %cst_5 = arith.constant 5.000000e-01 : f32
    %9 = vector.broadcast %cst_5 : f32 to vector<16x128xf32>
    %10 = arith.mulf %9, %8 : vector<16x128xf32>
    %11 = math.exp %10 : vector<16x128xf32>
    %c0_6 = arith.constant 0 : index
    %c0_7 = arith.constant 0 : index
    %12 = vector.load %arg4[%c0_6, %c0_7] : memref<16x128xf32, #tpu.memory_space<vmem>>, vector<16x128xf32>
    %13 = arith.mulf %12, %11 : vector<16x128xf32>
    %14 = arith.addf %7, %13 : vector<16x128xf32>
    %c0_8 = arith.constant 0 : index
    %c0_9 = arith.constant 0 : index
    %15 = vector.load %arg5[%c0_8, %c0_9] : memref<16x384xf32, #tpu.memory_space<vmem>>, vector<16x256xf32>
    tpu.vector_store %arg5[%c0_8, %c0_9], %6 {strides = array<i32>} : memref<16x384xf32, #tpu.memory_space<vmem>>, vector<16x256xf32>,
    %c0_10 = arith.constant 0 : index
    %c256 = arith.constant 256 : index
    %16 = vector.load %arg5[%c0_10, %c256] : memref<16x384xf32, #tpu.memory_space<vmem>>, vector<16x128xf32>
    tpu.vector_store %arg5[%c0_10, %c256], %14 {strides = array<i32>} : memref<16x384xf32, #tpu.memory_space<vmem>>, vector<16x128xf32>,
    return
  }
  func.func @transform_0(%arg0: i32) -> (i32, i32) {
    %c0_i32 = arith.constant 0 : i32
    %c0_i32_0 = arith.constant 0 : i32
    return %arg0, %c0_i32 : i32, i32
  }
  func.func @transform_1(%arg0: i32) -> (i32, i32) {
    %c0_i32 = arith.constant 0 : i32
    %c0_i32_0 = arith.constant 0 : i32
    %c0_i32_1 = arith.constant 0 : i32
    return %c0_i32, %c0_i32_0 : i32, i32
  }
  func.func @transform_2(%arg0: i32) -> (i32, i32) {
    %c0_i32 = arith.constant 0 : i32
    %c0_i32_0 = arith.constant 0 : i32
    %c0_i32_1 = arith.constant 0 : i32
    return %c0_i32, %c0_i32_0 : i32, i32
  }
  func.func @transform_3(%arg0: i32) -> (i32, i32) {
    %c0_i32 = arith.constant 0 : i32
    %c0_i32_0 = arith.constant 0 : i32
    return %arg0, %c0_i32 : i32, i32
  }
  func.func @transform_4(%arg0: i32) -> (i32, i32) {
    %c0_i32 = arith.constant 0 : i32
    %c0_i32_0 = arith.constant 0 : i32
    return %arg0, %c0_i32 : i32, i32
  }
}

</mosaic_0001>

<llo_original>
// kernel: tpu_custom_call.1
$region0: #{tpu_custom_call.1}
  #allocation0 [shape = 'u32[]', space=smem, size = 0x4, offset = 0x4, fixed_abs, tag = 'smem constant byte address 0x4 - core index']
  #allocation1 [shape = 'u32[144,128]{1,0:T(1,128)}', space=vmem, size = 0x12000, scoped, tag = 'internal scratch']
  %s0 = inlined_call_operand.hbm [shape: f32[16,32], index: 0, kind: input, shape index: {}]
  %s1 = inlined_call_operand.hbm [shape: bf16[32,256], index: 1, kind: input, shape index: {}]
  %s2 = inlined_call_operand.vmem [shape: f32[1,256], index: 2, kind: input, shape index: {}]
  %s3 = inlined_call_operand.hbm [shape: f32[16,128], index: 3, kind: input, shape index: {}]
  %s4 = inlined_call_operand.hbm [shape: f32[16,384], index: 4, kind: output, shape index: {}]
  %s5 = sld [smem:[#allocation0]]
  $region38: #{tpu_custom_call.1} parent=0
    _
  %s7 = ssub.s32 1, %s5
  %s8 = scalar_select 0, %s7, %s5
  $region1: #{tpu_custom_call.1} parent=0
    #allocation2 [shape = 'u8[8192]{0}', space=vmem, size = 0x2000, scoped, tag = 'input window, operand 0, single buffered']
    #allocation3 [shape = 's32[1]{0}', space=sflag, size = 0x4, scoped, tag = 'scoped memory for tpu_custom_call.1']
    #allocation4 [shape = 's32[1]{0}', space=sflag, size = 0x4, scoped, tag = 'scoped memory for tpu_custom_call.1']
    #allocation5 [shape = 'u8[16384]{0}', space=vmem, size = 0x4000, scoped, tag = 'input window, operand 1, single buffered']
    #allocation6 [shape = 's32[1]{0}', space=sflag, size = 0x4, scoped, tag = 'scoped memory for tpu_custom_call.1']
    #allocation7 [shape = 'u8[8192]{0}', space=vmem, size = 0x2000, scoped, tag = 'input window, operand 3, single buffered']
    #allocation8 [shape = 'u8[24576]{0}', space=vmem, size = 0x6000, scoped, tag = 'output window, operand 0, single buffered']
    %9 = vsyncpa [#allocation3], 0
    %10 = vsyncpa [#allocation6], 0
    %11 = vsyncpa [#allocation4], 0
    // Predicated region
    $region2: #{tpu_custom_call.1} parent=1 // pred_check
      _
    $region3: #{tpu_custom_call.1} parent=1 // pred_check_branch
      %13 = sbr.rel (0) target = $region5
    $region4: #{tpu_custom_call.1} parent=1 // pred_region
      %s15 = ssub.s32 256, 256
      %16 = vsyncadd [#allocation3], %s15
      %s17 = sshll.u32 [#allocation2], 4
      %s18 = int_to_ptr.vmem [resolvable:$true] %s17
      %23 = dma.hbm_to_vmem [thread:$0]  %s0, 256, %s18, [#allocation3], 128, 128, 8
    $region5: #{tpu_custom_call.1} parent=1 // pred_fallthru
      _
    // Predicated region
    $region6: #{tpu_custom_call.1} parent=1 // pred_check
      _
    $region7: #{tpu_custom_call.1} parent=1 // pred_check_branch
      %25 = sbr.rel (0) target = $region9
    $region8: #{tpu_custom_call.1} parent=1 // pred_region
      %s27 = ssub.s32 512, 512
      %28 = vsyncadd [#allocation6], %s27
      %s29 = sshll.u32 [#allocation5], 4
      %s30 = int_to_ptr.vmem [resolvable:$true] %s29
      %35 = dma.hbm_to_vmem [thread:$0]  %s1, 512, %s30, [#allocation6], 128, 128, 8
    $region9: #{tpu_custom_call.1} parent=1 // pred_fallthru
      _
    // Predicated region
    $region10: #{tpu_custom_call.1} parent=1 // pred_check
      _
    $region11: #{tpu_custom_call.1} parent=1 // pred_check_branch
      %37 = sbr.rel (0) target = $region13
    $region12: #{tpu_custom_call.1} parent=1 // pred_region
      _
    $region13: #{tpu_custom_call.1} parent=1 // pred_fallthru
      _
    // Predicated region
    $region14: #{tpu_custom_call.1} parent=1 // pred_check
      _
    $region15: #{tpu_custom_call.1} parent=1 // pred_check_branch
      %39 = sbr.rel (0) target = $region17
    $region16: #{tpu_custom_call.1} parent=1 // pred_region
      %s41 = ssub.s32 256, 256
      %42 = vsyncadd [#allocation6], %s41
      %s43 = sshll.u32 [#allocation7], 4
      %s44 = int_to_ptr.vmem [resolvable:$true] %s43
      %49 = dma.hbm_to_vmem [thread:$0]  %s3, 256, %s44, [#allocation6], 128, 128, 8
    $region17: #{tpu_custom_call.1} parent=1 // pred_fallthru
      _
    // Predicated region
    $region18: #{tpu_custom_call.1} parent=1 // pred_check
      _
    $region19: #{tpu_custom_call.1} parent=1 // pred_check_branch
      %51 = sbr.rel (0) target = $region21
    $region20: #{tpu_custom_call.1} parent=1 // pred_region
      %52 = dma.done [#allocation3], 256
    $region21: #{tpu_custom_call.1} parent=1 // pred_fallthru
      _
    // Predicated region
    $region22: #{tpu_custom_call.1} parent=1 // pred_check
      _
    $region23: #{tpu_custom_call.1} parent=1 // pred_check_branch
      %54 = sbr.rel (0) target = $region25
    $region24: #{tpu_custom_call.1} parent=1 // pred_region
      %55 = dma.done [#allocation6], 512
    $region25: #{tpu_custom_call.1} parent=1 // pred_fallthru
      _
    // Predicated region
    $region26: #{tpu_custom_call.1} parent=1 // pred_check
      _
    $region27: #{tpu_custom_call.1} parent=1 // pred_check_branch
      %57 = sbr.rel (0) target = $region29
    $region28: #{tpu_custom_call.1} parent=1 // pred_region
      %58 = dma.done [#allocation6], 256
    $region29: #{tpu_custom_call.1} parent=1 // pred_fallthru
      _
    %v60 = vld [vmem:[#allocation2] sm:$0xff]
    %v61 = vld [vmem:[#allocation2 + $0x8] sm:$0xff]
    %v62 = vpack.c.bf16 %v61, %v60
    %v63 = vld [vmem:[#allocation5] sm:$0xff]
    %v64 = vld [vmem:[#allocation5 + $0x8] sm:$0xff]
    %v65 = vld [vmem:[#allocation5 + $0x10] sm:$0xff]
    %v66 = vld [vmem:[#allocation5 + $0x18] sm:$0xff]
    %v67 = vld [vmem:[%s2] sm:$0x3]
    %v69 = vlaneseq
    %v70 = vshrl.u32 %v69, 7
    %v71 = vsub.s32 0, %v70
    %v72 = vrot.slane %v67, %v71
    %v73 = vlaneseq
    %v74 = vshrl.u32 %v73, 7
    %v75 = vsub.s32 1, %v74
    %v76 = vrot.slane %v67, %v75
    %v83 = vunpack.c.l.b16 %v63
    %v84 = vunpack.c.h.b16 %v63
    %v85 = vunpack.c.l.b16 %v64
    %v86 = vunpack.c.h.b16 %v64
    %v87 = vunpack.c.l.b16 %v65
    %v88 = vunpack.c.h.b16 %v65
    %v89 = vunpack.c.l.b16 %v66
    %v90 = vunpack.c.h.b16 %v66
    %v91 = vpack.c.b16 %v85, %v83
    %v92 = vpack.c.b16 %v86, %v84
    %v93 = vpack.c.b16 %v89, %v87
    %v94 = vpack.c.b16 %v90, %v88
    %vm99 = vcmask 261120
    %v101 = vsel %vm99, %v62, 0
    %103 = vmatprep.subr.bf16.mxu0 %v92
    %104 = vmatpush1.bf16.msra.mxu0 %v91
    %105 = vmatprep.subr.bf16.mxu0 %v94
    %106 = vmatpush1.bf16.msra.mxu0 %v93
    %107 = vmatprep.subr.bf16.mxu0 0
    %108 = vmatpush1.bf16.msra.mxu0 0
    %109 = vmatprep.subr.bf16.mxu0 0
    %110 = vmatpush1.bf16.msra.mxu0 0
    %111 = vmatprep.subr.bf16.mxu0 0
    %112 = vmatpush1.bf16.msra.mxu0 0
    %113 = vmatprep.subr.bf16.mxu0 0
    %114 = vmatpush1.bf16.msra.mxu0 0
    %115 = vmatprep.subr.bf16.mxu0 0
    %116 = vmatpush1.bf16.msra.mxu0 0
    %117 = vmatprep.subr.bf16.mxu0 0
    %118 = vmatpush1.bf16.msra.mxu0 0
    %119 = vmatprep.subr.bf16.mxu0 0
    %120 = vmatpush1.bf16.msra.mxu0 0
    %121 = vmatprep.subr.bf16.mxu0 0
    %122 = vmatpush1.bf16.msra.mxu0 0
    %123 = vmatprep.subr.bf16.mxu0 0
    %124 = vmatpush1.bf16.msra.mxu0 0
    %125 = vmatprep.subr.bf16.mxu0 0
    %126 = vmatpush1.bf16.msra.mxu0 0
    %127 = vmatprep.subr.bf16.mxu0 0
    %128 = vmatpush1.bf16.msra.mxu0 0
    %129 = vmatprep.subr.bf16.mxu0 0
    %130 = vmatpush1.bf16.msra.mxu0 0
    %131 = vmatprep.subr.bf16.mxu0 0
    %132 = vmatpush1.bf16.msra.mxu0 0
    %133 = vmatprep.subr.bf16.mxu0 0
    %134 = vmatpush1.bf16.msra.mxu0 0
    %135 = vmatprep.mubr.bf16.mxu0 0
    %136 = vmatmul.mubr.bf16.gmra.mrb[0].mxu0 %v101
    %v137 = vpop.f32.mrb[0].mxu0
    %v138 = vadd.f32 %v72, %v137
    %v139 = vpop.f32.mrb[0].mxu0
    %v140 = vadd.f32 %v76, %v139
    %v141 = vpop.f32.mrb[0].mxu0
    %v142 = vadd.f32 %v72, %v141
    %v143 = vpop.f32.mrb[0].mxu0
    %v144 = vadd.f32 %v76, %v143
    %145 = vdwg.mxu0
    %v146 = vmul.f32 %v140, 0.5
    %v147 = vmul.f32 %v144, 0.5
    %v148 = vmul.f32 %v146, 1.442695
    %v149 = vpow.pop %v148
    %v150 = vmul.f32 %v147, 1.442695
    %v151 = vpow.pop %v150
    %v152 = vld [vmem:[#allocation7] sm:$0xff]
    %v153 = vld [vmem:[#allocation7 + $0x8] sm:$0xff]
    %v154 = vmul.f32 %v152, %v149
    %v155 = vmul.f32 %v153, %v151
    %v156 = vadd.f32 %v138, %v154
    %v157 = vadd.f32 %v142, %v155
    %158 = vst [vmem:[#allocation8] sm:$0xff] %v138
    %159 = vst [vmem:[#allocation8 + $0x8] sm:$0xff] %v140
    %160 = vst [vmem:[#allocation8 + $0x18] sm:$0xff] %v142
    %161 = vst [vmem:[#allocation8 + $0x20] sm:$0xff] %v144
    %162 = vst [vmem:[#allocation8 + $0x10] sm:$0xff] %v156
    %163 = vst [vmem:[#allocation8 + $0x28] sm:$0xff] %v157
    // Predicated region
    $region30: #{tpu_custom_call.1} parent=1 // pred_check
      _
    $region31: #{tpu_custom_call.1} parent=1 // pred_check_branch
      %165 = sbr.rel (0) target = $region33
    $region32: #{tpu_custom_call.1} parent=1 // pred_region
      %s167 = ssub.s32 768, 768
      %168 = vsyncadd [#allocation4], %s167
      %s169 = sshll.u32 [#allocation8], 4
      %s170 = int_to_ptr.vmem [resolvable:$true] %s169
      %175 = dma.vmem_to_hbm [thread:$0]  %s170, 768, %s4, [#allocation4], 384, 384, 24
    $region33: #{tpu_custom_call.1} parent=1 // pred_fallthru
      _
    // Predicated region
    $region34: #{tpu_custom_call.1} parent=1 // pred_check
      _
    $region35: #{tpu_custom_call.1} parent=1 // pred_check_branch
      %177 = sbr.rel (0) target = $region37
    $region36: #{tpu_custom_call.1} parent=1 // pred_region
      %178 = dma.done [#allocation4], 768
    $region37: #{tpu_custom_call.1} parent=1 // pred_fallthru
      _
    %179 = vsyncpa [#allocation3], 1
    %180 = vsyncpa [#allocation6], 1
    %181 = vsyncpa [#allocation4], 1

</llo_original>
